<compile_context>
chip_gen: v5e
topology: v5e:2x2
jax: 0.10.0
libtpu: 0.0.40
codegen_flags: <defaults>
</compile_context>

<pallas_src>
import jax
import jax.numpy as jnp
from jax.experimental import pallas as pl
from jax.experimental.pallas import tpu as pltpu

# ---- small, TPU-friendly stand-in sizes (original: vis_out=512, n_cont=1399, text_out=128) ----
B = 2
VIS_OUT = 64
N_CONT = 48
TEXT_OUT = 16
F_TOTAL = VIS_OUT + N_CONT + TEXT_OUT   # 128 -> lane-aligned
KEY_CH = 96                             # AttentionLayer key_channels (as in the module)
HID = 128                               # fc1 output width
N_CLASSES = 2                           # fc2 output width
LANE_OUT = 128                          # lane-padded output width (== HID for bias packing)
BN_EPS = 1e-5
VOCAB, EMB, SEQ = 50, 16, 8
IMG_C, IMG_H, IMG_W = 3, 16, 16


def fused_head_kernel(s_ref, x_ref, w1_ref, b_ref, w2_ref, out_ref, res_ref):
    b_tile = x_ref.shape[0]            # static: rows handled by this grid step
    # s = wq.wk : the 1x1-conv Q/K pair is rank-1, so Q^T K == s * x x^T.
    s = s_ref[0]
    # Hoisted out of the row loop (broadcasts are not CSE'd across loop iterations).
    ones_row = jnp.ones((1, F_TOTAL), jnp.float32)

    def row_body(b, carry):
        # ReLU of the per-modality latents (relu commutes with the wrapper's concat).
        x = jnp.maximum(x_ref[pl.ds(b, 1), :], 0.0)                  # (1, F) one batch row

        # Rank-1 closed-form column max of l[i,j] = (s*x_i)*x_j (valid because x >= 0):
        #   m_j = x_j * max_i(s*x_i) = x_j * max(s*max(x), s*min(x))
        c = jnp.maximum(s * jnp.max(x), s * jnp.min(x))              # scalar lane-reduce
        m = c * x                                                    # (1, F) per-query maxima

        # Rank-1 attention logits as an outer product with s folded into one operand;
        # exp applied in place so the un-shifted logits tile never coexists with p^T.
        xc = (s * x).reshape(F_TOTAL, 1)                             # (F, 1) column relayout
        pt = jnp.exp(xc * x - m)                                     # (F, F) == p^T   (EUP)

        # Fused numerator + denominator in ONE MXU matmul: LHS = [x; ones].
        lhs = jnp.concatenate([x, ones_row], axis=0)                 # (2, F)
        nd = jnp.dot(lhs, pt, preferred_element_type=jnp.float32)    # (2, F): [num; den]
        res_ref[pl.ds(b, 1), :] = nd[0:1, :] / nd[1:2, :]            # A @ x  (wv folded into w1)
        return carry

    jax.lax.fori_loop(0, b_tile, row_body, 0, unroll=True)

    # fc1: BatchNorm1d (eval) + Dropout(0.5)=identity + Linear + ReLU, once per tile.
    # BN affine and the conv_V scalar are pre-folded into w1_ref / b_ref[0].
    res = res_ref[...]                                               # (Bt, F)
    h = jnp.dot(res, w1_ref[...], preferred_element_type=jnp.float32) + b_ref[0:1, :]
    h = jnp.maximum(h, 0.0)                                          # (Bt, HID)

    # fc2: Dropout(0.05)=identity + Linear + Sigmoid.  Weights are zero-padded to 128
    # output lanes so this store is an unmasked, lane-dense vst (wrapper slices).
    z = jnp.dot(h, w2_ref[...], preferred_element_type=jnp.float32) + b_ref[1:2, :]
    out_ref[...] = (1.0 / (1.0 + jnp.exp(-z))).astype(out_ref.dtype)


def fold_params(p):
    """Wrapper-side algebra: rank-1 Q/K scalar, BN(eval)+conv_V folded into fc1,
    fc2 zero-padded to a 128-lane slab, both bias rows packed into one array."""
    # conv_Q/conv_K collapse: Q^T K = (wq.wk) * x x^T
    s = jnp.sum(p['wq'] * p['wk']).reshape(1).astype(jnp.float32)          # (1,) -> SMEM

    # BatchNorm1d eval affine + conv_V scalar folded into the fc1 linear:
    #   h = BN(wv*(A@x)) @ w1 + b1 = (A@x) @ (wv*inv*w1) + (beta - mean*inv) @ w1 + b1
    inv = p['bn_gamma'] * jax.lax.rsqrt(p['bn_var'] + BN_EPS)              # (1, F)
    wv = p['wv'][0, 0]
    w1f = (wv * inv.T) * p['w1']                                           # (F, HID)
    b1f = (p['bn_beta'] - p['bn_mean'] * inv) @ p['w1'] + p['b1']          # (1, HID)

    # fc2 zero-padded to LANE_OUT output lanes; pack fc1/fc2 biases together (HID == LANE_OUT).
    w2p = jnp.zeros((HID, LANE_OUT), jnp.float32).at[:, :N_CLASSES].set(p['w2'])
    b2p = jnp.zeros((1, LANE_OUT), jnp.float32).at[:, :N_CLASSES].set(p['b2'])
    bias = jnp.concatenate([b1f, b2p], axis=0)                             # (2, LANE_OUT)
    return dict(s=s, w1f=w1f, bias=bias, w2p=w2p)


def fused_head(cat_feature, folded):
    bsz = cat_feature.shape[0]
    # Whole batch in one grid step (optimal on single-TC v5e/v6e; at these sizes also
    # fine on v7x).  For v7x with larger B, pick batch_tile = bsz // 2 (a multiple of 8)
    # so the 2-wide "parallel" grid splits rows across the two TensorCores.
    batch_tile = bsz
    grid = (pl.cdiv(bsz, batch_tile),)
    out = pl.pallas_call(
        fused_head_kernel,
        out_shape=jax.ShapeDtypeStruct((bsz, LANE_OUT), jnp.float32),
        grid=grid,
        in_specs=[
            pl.BlockSpec(memory_space=pltpu.MemorySpace.SMEM),             # s = wq.wk (scalar)
            pl.BlockSpec((batch_tile, F_TOTAL), lambda t: (t, 0)),         # batch tile of features
            pl.BlockSpec((F_TOTAL, HID), lambda t: (0, 0)),                # BN/wv-folded fc1 weight
            pl.BlockSpec((2, LANE_OUT), lambda t: (0, 0)),                 # packed fc1/fc2 biases
            pl.BlockSpec((HID, LANE_OUT), lambda t: (0, 0)),               # lane-padded fc2 weight
        ],
        out_specs=pl.BlockSpec((batch_tile, LANE_OUT), lambda t: (t, 0)),
        scratch_shapes=[pltpu.VMEM((batch_tile, F_TOTAL), jnp.float32)],   # per-tile attention rows
        compiler_params=pltpu.CompilerParams(
            dimension_semantics=("parallel",)),
    )(folded['s'], cat_feature, folded['w1f'], folded['bias'], folded['w2p'])
    return out[:, :N_CLASSES]


def init_params(key):
    ks = jax.random.split(key, 14)
    s = 0.05
    return dict(
        # image surrogate: GAP over (H, W) -> Linear(C, VIS_OUT)
        w_img=jax.random.normal(ks[0], (IMG_C, VIS_OUT), jnp.float32) * s,
        b_img=jnp.zeros((VIS_OUT,), jnp.float32),
        # text surrogate: Embedding -> mean pool -> Linear(EMB, TEXT_OUT)
        emb=jax.random.normal(ks[1], (VOCAB, EMB), jnp.float32) * s,
        w_txt=jax.random.normal(ks[2], (EMB, TEXT_OUT), jnp.float32) * s,
        b_txt=jnp.zeros((TEXT_OUT,), jnp.float32),
        # AttentionLayer 1x1 Conv1d weights (no bias): (out_ch, in_ch=1, k=1) flattened
        wq=jax.random.normal(ks[3], (1, KEY_CH), jnp.float32) * s,
        wk=jax.random.normal(ks[4], (1, KEY_CH), jnp.float32) * s,
        wv=jax.random.normal(ks[5], (1, 1), jnp.float32) * s,
        # fc1: BatchNorm1d(F_TOTAL) running stats + affine (non-trivial so the BN fold is
        # actually exercised by the correctness check), Linear(F_TOTAL, HID)
        bn_gamma=1.0 + 0.1 * jax.random.normal(ks[6], (1, F_TOTAL), jnp.float32),
        bn_beta=0.1 * jax.random.normal(ks[7], (1, F_TOTAL), jnp.float32),
        bn_mean=0.1 * jax.random.normal(ks[8], (1, F_TOTAL), jnp.float32),
        bn_var=jax.random.uniform(ks[9], (1, F_TOTAL), jnp.float32, 0.5, 1.5),
        w1=jax.random.normal(ks[10], (F_TOTAL, HID), jnp.float32) * s,
        b1=0.1 * jax.random.normal(ks[11], (1, HID), jnp.float32),
        # fc2: Linear(HID, 2)
        w2=jax.random.normal(ks[12], (HID, N_CLASSES), jnp.float32) * s,
        b2=0.1 * jax.random.normal(ks[13], (1, N_CLASSES), jnp.float32),
    )


def image_tabular_text_forward(params, img, tab, text):
    # TODO(synk): resnet50 backbone (create_cnn_model) not translated; surrogate = GAP + Linear.
    img_lat = jnp.mean(img, axis=(2, 3)) @ params['w_img'] + params['b_img']               # (B, VIS_OUT)
    # tab is the continuous-feature tensor x_cont; forward uses relu(tab[-1]) for batch > 1.
    # TODO(synk): batch-size-1 torch.rand fallback not reproduced (requires B == 1).
    tab_lat = tab                                                                           # (B, N_CONT)
    # TODO(synk): AWD-LSTM SequentialRNN + PoolingLinearClassifier not translated;
    #             surrogate = mean-pooled embedding + Linear.
    text_lat = jnp.mean(params['emb'][text], axis=1) @ params['w_txt'] + params['b_txt']    # (B, TEXT_OUT)

    # relu of the latents is applied inside the kernel (relu commutes with concat).
    cat_feature = jnp.concatenate([img_lat, tab_lat, text_lat], axis=1)                     # (B, F_TOTAL)
    return fused_head(cat_feature, fold_params(params))


def reference_head(cat_feature, p):
    """Pure-JAX reference of the original (un-rewritten) head math."""
    x = jnp.maximum(cat_feature, 0.0)
    Q = p['wq'][None, 0, :, None] * x[:, None, :]        # (B, KEY_CH, F)
    K = p['wk'][None, 0, :, None] * x[:, None, :]
    A = jax.nn.softmax(jnp.einsum('bci,bcj->bij', Q, K), axis=2)
    V = p['wv'][0, 0] * x                                # (B, F)
    res = jnp.einsum('bij,bj->bi', A, V)
    xn = (res - p['bn_mean']) / jnp.sqrt(p['bn_var'] + BN_EPS) * p['bn_gamma'] + p['bn_beta']
    h = jnp.maximum(xn @ p['w1'] + p['b1'], 0.0)
    return jax.nn.sigmoid(h @ p['w2'] + p['b2'])


if __name__ == "__main__":
    key = jax.random.PRNGKey(0)
    k_img, k_tab, k_txt, k_par = jax.random.split(key, 4)

    img = jax.random.normal(k_img, (B, IMG_C, IMG_H, IMG_W), jnp.float32)   # NCHW
    tab = jax.random.normal(k_tab, (B, N_CONT), jnp.float32)                # x_cont
    text = jax.random.randint(k_txt, (B, SEQ), 0, VOCAB, jnp.int32)         # token ids

    params = init_params(k_par)

    pred = jax.block_until_ready(image_tabular_text_forward(params, img, tab, text))
    assert pred.shape == (B, N_CLASSES)

    # validate the fused, algebraically-rewritten kernel against the original head math
    img_lat = jnp.mean(img, axis=(2, 3)) @ params['w_img'] + params['b_img']
    text_lat = jnp.mean(params['emb'][text], axis=1) @ params['w_txt'] + params['b_txt']
    cat_feature = jnp.concatenate([img_lat, tab, text_lat], axis=1)
    ref = reference_head(cat_feature, params)
    assert jnp.allclose(pred, ref, atol=1e-3, rtol=1e-3), float(jnp.max(jnp.abs(pred - ref)))

    print("KERNEL_OK")
</pallas_src>

<mosaic_0001>
module attributes {stable_mosaic.version = 11 : i64} {
  func.func @fused_head_kernel(%arg0: i32, %arg1: memref<1xf32, #tpu.memory_space<smem>>, %arg2: memref<2x128xf32, #tpu.memory_space<vmem>>, %arg3: memref<128x128xf32, #tpu.memory_space<vmem>>, %arg4: memref<2x128xf32, #tpu.memory_space<vmem>>, %arg5: memref<128x128xf32, #tpu.memory_space<vmem>>, %arg6: memref<2x128xf32, #tpu.memory_space<vmem>>, %arg7: memref<2x128xf32, #tpu.memory_space<vmem>>) attributes {dimension_semantics = [#tpu.dimension_semantics<parallel>], iteration_bounds = array<i64: 1>, scalar_prefetch = 0 : i64, scratch_operands = 1 : i64, tpu.core_type = #tpu.core_type<tc>, window_params = [{transform_indices = @transform_0, window_bounds = array<i64: 1>}, {transform_indices = @transform_1, window_bounds = array<i64: 2, 128>}, {pipeline_mode = #tpu.pipeline_mode<synchronous>, transform_indices = @transform_2, window_bounds = array<i64: 128, 128>}, {pipeline_mode = #tpu.pipeline_mode<synchronous>, transform_indices = @transform_3, window_bounds = array<i64: 2, 128>}, {pipeline_mode = #tpu.pipeline_mode<synchronous>, transform_indices = @transform_4, window_bounds = array<i64: 128, 128>}, {transform_indices = @transform_5, window_bounds = array<i64: 2, 128>}]} {
    %c0 = arith.constant 0 : index
    %0 = memref.load %arg1[%c0] : memref<1xf32, #tpu.memory_space<smem>>
    %cst = arith.constant 1.000000e+00 : f32
    %1 = vector.broadcast %cst : f32 to vector<1x128xf32>
    %c0_i32 = arith.constant 0 : i32
    %2 = arith.index_cast %c0_i32 : i32 to index
    %c0_0 = arith.constant 0 : index
    %3 = vector.load %arg2[%2, %c0_0] : memref<2x128xf32, #tpu.memory_space<vmem>>, vector<1x128xf32>
    %cst_1 = arith.constant 0.000000e+00 : f32
    %4 = vector.broadcast %cst_1 : f32 to vector<1x128xf32>
    %5 = arith.maximumf %3, %4 : vector<1x128xf32>
    %6 = vector.shape_cast %5 : vector<1x128xf32> to vector<1x1x128xf32>
    %cst_2 = arith.constant dense<0xFF800000> : vector<1xf32>
    %7 = vector.multi_reduction <maximumf>, %6, %cst_2 [1, 2] : vector<1x1x128xf32> to vector<1xf32>
    %8 = vector.shape_cast %7 : vector<1xf32> to vector<1x1x1xf32>
    %9 = vector.extract %8[0, 0, 0] : f32 from vector<1x1x1xf32>
    %10 = arith.mulf %0, %9 : f32
    %11 = vector.shape_cast %5 : vector<1x128xf32> to vector<1x1x128xf32>
    %cst_3 = arith.constant dense<0x7F800000> : vector<1xf32>
    %12 = vector.multi_reduction <minimumf>, %11, %cst_3 [1, 2] : vector<1x1x128xf32> to vector<1xf32>
    %13 = vector.shape_cast %12 : vector<1xf32> to vector<1x1x1xf32>
    %14 = vector.extract %13[0, 0, 0] : f32 from vector<1x1x1xf32>
    %15 = arith.mulf %0, %14 : f32
    %16 = arith.maximumf %10, %15 : f32
    %17 = vector.broadcast %16 : f32 to vector<1x128xf32>
    %18 = arith.mulf %17, %5 : vector<1x128xf32>
    %19 = vector.broadcast %0 : f32 to vector<1x128xf32>
    %20 = arith.mulf %19, %5 : vector<1x128xf32>
    %21 = vector.shape_cast %20 : vector<1x128xf32> to vector<128x1xf32>
    %22 = vector.broadcast %21 : vector<128x1xf32> to vector<128x128xf32>
    %23 = vector.broadcast %5 : vector<1x128xf32> to vector<128x128xf32>
    %24 = arith.mulf %22, %23 : vector<128x128xf32>
    %25 = vector.broadcast %18 : vector<1x128xf32> to vector<128x128xf32>
    %26 = arith.subf %24, %25 : vector<128x128xf32>
    %27 = math.exp %26 : vector<128x128xf32>
    %28 = tpu.concatenate %5, %1 in 0 : vector<1x128xf32>, vector<1x128xf32> -> vector<2x128xf32>
    %cst_4 = arith.constant dense<0.000000e+00> : vector<2x128xf32>
    %29 = tpu.matmul %28, %27, %cst_4 {dimension_numbers = #tpu.dot_dimension_numbers<[1], [0], [0], [1], [0, 0, 1, 1], [], []>} : vector<2x128xf32>, vector<128x128xf32>, vector<2x128xf32> -> vector<2x128xf32>
    %30 = vector.extract_strided_slice %29 {offsets = [0, 0], sizes = [1, 128], strides = [1, 1]} : vector<2x128xf32> to vector<1x128xf32>
    %31 = vector.extract_strided_slice %29 {offsets = [1, 0], sizes = [1, 128], strides = [1, 1]} : vector<2x128xf32> to vector<1x128xf32>
    %32 = arith.divf %30, %31 : vector<1x128xf32>
    %33 = arith.index_cast %c0_i32 : i32 to index
    %c0_5 = arith.constant 0 : index
    %34 = vector.load %arg7[%33, %c0_5] : memref<2x128xf32, #tpu.memory_space<vmem>>, vector<1x128xf32>
    tpu.vector_store %arg7[%33, %c0_5], %32 {strides = array<i32>} : memref<2x128xf32, #tpu.memory_space<vmem>>, vector<1x128xf32>,
    %c1_i32 = arith.constant 1 : i32
    %35 = arith.index_cast %c1_i32 : i32 to index
    %c0_6 = arith.constant 0 : index
    %36 = vector.load %arg2[%35, %c0_6] : memref<2x128xf32, #tpu.memory_space<vmem>>, vector<1x128xf32>
    %cst_7 = arith.constant 0.000000e+00 : f32
    %37 = vector.broadcast %cst_7 : f32 to vector<1x128xf32>
    %38 = arith.maximumf %36, %37 : vector<1x128xf32>
    %39 = vector.shape_cast %38 : vector<1x128xf32> to vector<1x1x128xf32>
    %cst_8 = arith.constant dense<0xFF800000> : vector<1xf32>
    %40 = vector.multi_reduction <maximumf>, %39, %cst_8 [1, 2] : vector<1x1x128xf32> to vector<1xf32>
    %41 = vector.shape_cast %40 : vector<1xf32> to vector<1x1x1xf32>
    %42 = vector.extract %41[0, 0, 0] : f32 from vector<1x1x1xf32>
    %43 = arith.mulf %0, %42 : f32
    %44 = vector.shape_cast %38 : vector<1x128xf32> to vector<1x1x128xf32>
    %cst_9 = arith.constant dense<0x7F800000> : vector<1xf32>
    %45 = vector.multi_reduction <minimumf>, %44, %cst_9 [1, 2] : vector<1x1x128xf32> to vector<1xf32>
    %46 = vector.shape_cast %45 : vector<1xf32> to vector<1x1x1xf32>
    %47 = vector.extract %46[0, 0, 0] : f32 from vector<1x1x1xf32>
    %48 = arith.mulf %0, %47 : f32
    %49 = arith.maximumf %43, %48 : f32
    %50 = vector.broadcast %49 : f32 to vector<1x128xf32>
    %51 = arith.mulf %50, %38 : vector<1x128xf32>
    %52 = vector.broadcast %0 : f32 to vector<1x128xf32>
    %53 = arith.mulf %52, %38 : vector<1x128xf32>
    %54 = vector.shape_cast %53 : vector<1x128xf32> to vector<128x1xf32>
    %55 = vector.broadcast %54 : vector<128x1xf32> to vector<128x128xf32>
    %56 = vector.broadcast %38 : vector<1x128xf32> to vector<128x128xf32>
    %57 = arith.mulf %55, %56 : vector<128x128xf32>
    %58 = vector.broadcast %51 : vector<1x128xf32> to vector<128x128xf32>
    %59 = arith.subf %57, %58 : vector<128x128xf32>
    %60 = math.exp %59 : vector<128x128xf32>
    %61 = tpu.concatenate %38, %1 in 0 : vector<1x128xf32>, vector<1x128xf32> -> vector<2x128xf32>
    %cst_10 = arith.constant dense<0.000000e+00> : vector<2x128xf32>
    %62 = tpu.matmul %61, %60, %cst_10 {dimension_numbers = #tpu.dot_dimension_numbers<[1], [0], [0], [1], [0, 0, 1, 1], [], []>} : vector<2x128xf32>, vector<128x128xf32>, vector<2x128xf32> -> vector<2x128xf32>
    %63 = vector.extract_strided_slice %62 {offsets = [0, 0], sizes = [1, 128], strides = [1, 1]} : vector<2x128xf32> to vector<1x128xf32>
    %64 = vector.extract_strided_slice %62 {offsets = [1, 0], sizes = [1, 128], strides = [1, 1]} : vector<2x128xf32> to vector<1x128xf32>
    %65 = arith.divf %63, %64 : vector<1x128xf32>
    %66 = arith.index_cast %c1_i32 : i32 to index
    %c0_11 = arith.constant 0 : index
    %67 = vector.load %arg7[%66, %c0_11] : memref<2x128xf32, #tpu.memory_space<vmem>>, vector<1x128xf32>
    tpu.vector_store %arg7[%66, %c0_11], %65 {strides = array<i32>} : memref<2x128xf32, #tpu.memory_space<vmem>>, vector<1x128xf32>,
    %c2_i32 = arith.constant 2 : i32
    %c0_12 = arith.constant 0 : index
    %c0_13 = arith.constant 0 : index
    %68 = vector.load %arg7[%c0_12, %c0_13] : memref<2x128xf32, #tpu.memory_space<vmem>>, vector<2x128xf32>
    %c0_14 = arith.constant 0 : index
    %c0_15 = arith.constant 0 : index
    %69 = vector.load %arg3[%c0_14, %c0_15] : memref<128x128xf32, #tpu.memory_space<vmem>>, vector<128x128xf32>
    %cst_16 = arith.constant dense<0.000000e+00> : vector<2x128xf32>
    %70 = tpu.matmul %68, %69, %cst_16 {dimension_numbers = #tpu.dot_dimension_numbers<[1], [0], [0], [1], [0, 0, 1, 1], [], []>} : vector<2x128xf32>, vector<128x128xf32>, vector<2x128xf32> -> vector<2x128xf32>
    %c0_17 = arith.constant 0 : index
    %c0_18 = arith.constant 0 : index
    %71 = vector.load %arg4[%c0_17, %c0_18] : memref<2x128xf32, #tpu.memory_space<vmem>>, vector<1x128xf32>
    %72 = vector.broadcast %71 : vector<1x128xf32> to vector<2x128xf32>
    %73 = arith.addf %70, %72 : vector<2x128xf32>
    %cst_19 = arith.constant 0.000000e+00 : f32
    %74 = vector.broadcast %cst_19 : f32 to vector<2x128xf32>
    %75 = arith.maximumf %73, %74 : vector<2x128xf32>
    %c0_20 = arith.constant 0 : index
    %c0_21 = arith.constant 0 : index
    %76 = vector.load %arg5[%c0_20, %c0_21] : memref<128x128xf32, #tpu.memory_space<vmem>>, vector<128x128xf32>
    %cst_22 = arith.constant dense<0.000000e+00> : vector<2x128xf32>
    %77 = tpu.matmul %75, %76, %cst_22 {dimension_numbers = #tpu.dot_dimension_numbers<[1], [0], [0], [1], [0, 0, 1, 1], [], []>} : vector<2x128xf32>, vector<128x128xf32>, vector<2x128xf32> -> vector<2x128xf32>
    %c1 = arith.constant 1 : index
    %c0_23 = arith.constant 0 : index
    %78 = vector.load %arg4[%c1, %c0_23] : memref<2x128xf32, #tpu.memory_space<vmem>>, vector<1x128xf32>
    %79 = vector.broadcast %78 : vector<1x128xf32> to vector<2x128xf32>
    %80 = arith.addf %77, %79 : vector<2x128xf32>
    %cst_24 = arith.constant 0.000000e+00 : f32
    %81 = vector.broadcast %cst_24 : f32 to vector<2x128xf32>
    %82 = arith.subf %81, %80 : vector<2x128xf32>
    %83 = math.exp %82 : vector<2x128xf32>
    %cst_25 = arith.constant 1.000000e+00 : f32
    %84 = vector.broadcast %cst_25 : f32 to vector<2x128xf32>
    %85 = arith.addf %84, %83 : vector<2x128xf32>
    %cst_26 = arith.constant 1.000000e+00 : f32
    %86 = vector.broadcast %cst_26 : f32 to vector<2x128xf32>
    %87 = arith.divf %86, %85 : vector<2x128xf32>
    %c0_27 = arith.constant 0 : index
    %c0_28 = arith.constant 0 : index
    %88 = vector.load %arg6[%c0_27, %c0_28] : memref<2x128xf32, #tpu.memory_space<vmem>>, vector<2x128xf32>
    tpu.vector_store %arg6[%c0_27, %c0_28], %87 {strides = array<i32>} : memref<2x128xf32, #tpu.memory_space<vmem>>, vector<2x128xf32>,
    return
  }
  func.func @transform_0(%arg0: i32) -> i32 {
    %c0_i32 = arith.constant 0 : i32
    %c0_i32_0 = arith.constant 0 : i32
    return %c0_i32 : i32
  }
  func.func @transform_1(%arg0: i32) -> (i32, i32) {
    %c0_i32 = arith.constant 0 : i32
    %c0_i32_0 = arith.constant 0 : i32
    return %arg0, %c0_i32 : i32, i32
  }
  func.func @transform_2(%arg0: i32) -> (i32, i32) {
    %c0_i32 = arith.constant 0 : i32
    %c0_i32_0 = arith.constant 0 : i32
    %c0_i32_1 = arith.constant 0 : i32
    return %c0_i32, %c0_i32_0 : i32, i32
  }
  func.func @transform_3(%arg0: i32) -> (i32, i32) {
    %c0_i32 = arith.constant 0 : i32
    %c0_i32_0 = arith.constant 0 : i32
    %c0_i32_1 = arith.constant 0 : i32
    return %c0_i32, %c0_i32_0 : i32, i32
  }
  func.func @transform_4(%arg0: i32) -> (i32, i32) {
    %c0_i32 = arith.constant 0 : i32
    %c0_i32_0 = arith.constant 0 : i32
    %c0_i32_1 = arith.constant 0 : i32
    return %c0_i32, %c0_i32_0 : i32, i32
  }
  func.func @transform_5(%arg0: i32) -> (i32, i32) {
    %c0_i32 = arith.constant 0 : i32
    %c0_i32_0 = arith.constant 0 : i32
    return %arg0, %c0_i32 : i32, i32
  }
}

</mosaic_0001>

<llo_original>
// kernel: tpu_custom_call.1
$region0: #{tpu_custom_call.1}
  #allocation0 [shape = 'u32[]', space=smem, size = 0x4, offset = 0x4, fixed_abs, tag = 'smem constant byte address 0x4 - core index']
  #allocation1 [shape = 'u32[72,128]{1,0:T(1,128)}', space=vmem, size = 0x9000, scoped, tag = 'internal scratch']
  #allocation2 [shape = 'f32[2,128]{1,0:T(2,128)}', space=vmem, size = 0x400, scoped, tag = 'scratch operand']
  #allocation3 [shape = 'f32[1]{0:T(128)S(6)}', space=smem, size = 0x200, scoped, tag = 'scoped memory for tpu_custom_call.1']
  %s0 = inlined_call_operand.<no memory space> [shape: f32[1], index: 0, kind: input, shape index: {}]
  %s1 = inlined_call_operand.vmem [shape: f32[2,128], index: 1, kind: input, shape index: {}]
  %s2 = inlined_call_operand.hbm [shape: f32[128,128], index: 2, kind: input, shape index: {}]
  %s3 = inlined_call_operand.hbm [shape: f32[2,128], index: 3, kind: input, shape index: {}]
  %s4 = inlined_call_operand.hbm [shape: f32[128,128], index: 4, kind: input, shape index: {}]
  %s5 = inlined_call_operand.hbm [shape: f32[2,128], index: 5, kind: output, shape index: {}]
  %s6 = sld [smem:[#allocation0]]
  $region42: #{tpu_custom_call.1} parent=0
    _
  %s8 = ssub.s32 1, %s6
  %s9 = scalar_select 0, %s8, %s6
  %10 = sst [smem:[#allocation3]] %s0
  $region1: #{tpu_custom_call.1} parent=0
    #allocation4 [shape = 'u8[65536]{0}', space=vmem, size = 0x10000, scoped, tag = 'input window, operand 2, single buffered']
    #allocation5 [shape = 's32[1]{0}', space=sflag, size = 0x4, scoped, tag = 'scoped memory for tpu_custom_call.1']
    #allocation6 [shape = 's32[1]{0}', space=sflag, size = 0x4, scoped, tag = 'scoped memory for tpu_custom_call.1']
    #allocation7 [shape = 'u8[1024]{0}', space=vmem, size = 0x400, scoped, tag = 'input window, operand 3, single buffered']
    #allocation8 [shape = 's32[1]{0}', space=sflag, size = 0x4, scoped, tag = 'scoped memory for tpu_custom_call.1']
    #allocation9 [shape = 'u8[65536]{0}', space=vmem, size = 0x10000, scoped, tag = 'input window, operand 4, single buffered']
    #allocation10 [shape = 'u8[1024]{0}', space=vmem, size = 0x400, scoped, tag = 'output window, operand 0, single buffered']
    %11 = vsyncpa [#allocation5], 0
    %12 = vsyncpa [#allocation8], 0
    %13 = vsyncpa [#allocation6], 0
    // Predicated region
    $region2: #{tpu_custom_call.1} parent=1 // pred_check
      _
    $region3: #{tpu_custom_call.1} parent=1 // pred_check_branch
      %15 = sbr.rel (0) target = $region5
    $region4: #{tpu_custom_call.1} parent=1 // pred_region
      _
    $region5: #{tpu_custom_call.1} parent=1 // pred_fallthru
      _
    // Predicated region
    $region6: #{tpu_custom_call.1} parent=1 // pred_check
      _
    $region7: #{tpu_custom_call.1} parent=1 // pred_check_branch
      %17 = sbr.rel (0) target = $region9
    $region8: #{tpu_custom_call.1} parent=1 // pred_region
      _
    $region9: #{tpu_custom_call.1} parent=1 // pred_fallthru
      _
    // Predicated region
    $region10: #{tpu_custom_call.1} parent=1 // pred_check
      _
    $region11: #{tpu_custom_call.1} parent=1 // pred_check_branch
      %19 = sbr.rel (0) target = $region13
    $region12: #{tpu_custom_call.1} parent=1 // pred_region
      %21 = vsyncadd [#allocation5], 0
      %s22 = sshll.u32 %s2, 4
      %s23 = int_to_ptr.hbm [resolvable:$true] %s22
      %s24 = sshll.u32 [#allocation4], 4
      %s25 = int_to_ptr.vmem [resolvable:$true] %s24
      %30 = dma.hbm_to_vmem [thread:$0]  %s23, 2048, %s25, [#allocation5], 128, 128, 8
    $region13: #{tpu_custom_call.1} parent=1 // pred_fallthru
      _
    // Predicated region
    $region14: #{tpu_custom_call.1} parent=1 // pred_check
      _
    $region15: #{tpu_custom_call.1} parent=1 // pred_check_branch
      %32 = sbr.rel (0) target = $region17
    $region16: #{tpu_custom_call.1} parent=1 // pred_region
      %34 = vsyncadd [#allocation8], 0
      %s36 = sshll.u32 %s3, 4
      %s37 = int_to_ptr.hbm [resolvable:$true] %s36
      %s38 = sshll.u32 [#allocation7], 4
      %s39 = int_to_ptr.vmem [resolvable:$true] %s38
      %41 = dma.hbm_to_vmem [thread:$0]  %s37, 32, %s39, [#allocation8]
    $region17: #{tpu_custom_call.1} parent=1 // pred_fallthru
      _
    // Predicated region
    $region18: #{tpu_custom_call.1} parent=1 // pred_check
      _
    $region19: #{tpu_custom_call.1} parent=1 // pred_check_branch
      %43 = sbr.rel (0) target = $region21
    $region20: #{tpu_custom_call.1} parent=1 // pred_region
      %45 = vsyncadd [#allocation8], 0
      %s46 = sshll.u32 %s4, 4
      %s47 = int_to_ptr.hbm [resolvable:$true] %s46
      %s48 = sshll.u32 [#allocation9], 4
      %s49 = int_to_ptr.vmem [resolvable:$true] %s48
      %54 = dma.hbm_to_vmem [thread:$0]  %s47, 2048, %s49, [#allocation8], 128, 128, 8
    $region21: #{tpu_custom_call.1} parent=1 // pred_fallthru
      _
    // Predicated region
    $region22: #{tpu_custom_call.1} parent=1 // pred_check
      _
    $region23: #{tpu_custom_call.1} parent=1 // pred_check_branch
      %56 = sbr.rel (0) target = $region25
    $region24: #{tpu_custom_call.1} parent=1 // pred_region
      %58 = dma.done [#allocation5], 2048
    $region25: #{tpu_custom_call.1} parent=1 // pred_fallthru
      _
    // Predicated region
    $region26: #{tpu_custom_call.1} parent=1 // pred_check
      _
    $region27: #{tpu_custom_call.1} parent=1 // pred_check_branch
      %60 = sbr.rel (0) target = $region29
    $region28: #{tpu_custom_call.1} parent=1 // pred_region
      %62 = dma.done [#allocation8], 32
    $region29: #{tpu_custom_call.1} parent=1 // pred_fallthru
      _
    // Predicated region
    $region30: #{tpu_custom_call.1} parent=1 // pred_check
      _
    $region31: #{tpu_custom_call.1} parent=1 // pred_check_branch
      %64 = sbr.rel (0) target = $region33
    $region32: #{tpu_custom_call.1} parent=1 // pred_region
      %66 = dma.done [#allocation8], 2048
    $region33: #{tpu_custom_call.1} parent=1 // pred_fallthru
      _
    %s67 = sld [smem:[#allocation3]]
    %v68 = vld [vmem:[%s1] sm:$0x1]
    %v69 = vmax.f32 %v68, 0.0
    %vm70 = vcmask 1040384
    %v71 = vsel %vm70, %v69, -inf
    %72 = vmax.xlane.f32.xlu0 %v71
    %v73 = vpop.xlane.xlu0 %72
    %v74 = vrot.slane %v73, 4
    %v75 = vmax.f32 %v73, %v74
    %v76 = vrot.slane %v75, 2
    %v77 = vmax.f32 %v75, %v76
    %v78 = vrot.slane %v77, 1
    %v79 = vmax.f32 %v77, %v78
    %s80 = vtos %v79
    %s81 = smul.f32 %s67, %s80
    %v82 = vsel %vm70, %v69, inf
    %83 = vmin.xlane.f32.xlu0 %v82
    %v84 = vpop.xlane.xlu0 %83
    %v85 = vrot.slane %v84, 4
    %v86 = vmin.f32 %v84, %v85
    %v87 = vrot.slane %v86, 2
    %v88 = vmin.f32 %v86, %v87
    %v89 = vrot.slane %v88, 1
    %v90 = vmin.f32 %v88, %v89
    %s91 = vtos %v90
    %s92 = smul.f32 %s67, %s91
    %s93 = smax.f32 %s81, %s92
    %v94 = vstv %s93
    %v95 = vmul.f32 %v94, %v69
    %v96 = vstv %s67
    %v97 = vmul.f32 %v96, %v69
    %v98 = vperm.slane %v97, 0
    %v99 = vlaneseq
    %v100 = vshrl.u32 %v99, 7
    %102 = vset.pattern.permute.xlu0 %v100
    %103 = vperm.xlu0 %102, %v98
    %v104 = vpop.permute.xlu0 %103
    %v105 = vlaneseq
    %v106 = vshrl.u32 %v105, 7
    %v107 = vadd.s32 %v106, 8
    %108 = vset.pattern.permute.xlu0 %v107
    %109 = vperm.xlu0 %108, %v98
    %v110 = vpop.permute.xlu0 %109
    %v111 = vlaneseq
    %v112 = vshrl.u32 %v111, 7
    %v113 = vadd.s32 %v112, 16
    %114 = vset.pattern.permute.xlu0 %v113
    %115 = vperm.xlu0 %114, %v98
    %v116 = vpop.permute.xlu0 %115
    %v117 = vlaneseq
    %v118 = vshrl.u32 %v117, 7
    %v119 = vadd.s32 %v118, 24
    %120 = vset.pattern.permute.xlu0 %v119
    %121 = vperm.xlu0 %120, %v98
    %v122 = vpop.permute.xlu0 %121
    %v123 = vlaneseq
    %v124 = vshrl.u32 %v123, 7
    %v125 = vadd.s32 %v124, 32
    %126 = vset.pattern.permute.xlu0 %v125
    %127 = vperm.xlu0 %126, %v98
    %v128 = vpop.permute.xlu0 %127
    %v129 = vlaneseq
    %v130 = vshrl.u32 %v129, 7
    %v131 = vadd.s32 %v130, 40
    %132 = vset.pattern.permute.xlu0 %v131
    %133 = vperm.xlu0 %132, %v98
    %v134 = vpop.permute.xlu0 %133
    %v135 = vlaneseq
    %v136 = vshrl.u32 %v135, 7
    %v137 = vadd.s32 %v136, 48
    %138 = vset.pattern.permute.xlu0 %v137
    %139 = vperm.xlu0 %138, %v98
    %v140 = vpop.permute.xlu0 %139
    %v141 = vlaneseq
    %v142 = vshrl.u32 %v141, 7
    %v143 = vadd.s32 %v142, 56
    %144 = vset.pattern.permute.xlu0 %v143
    %145 = vperm.xlu0 %144, %v98
    %v146 = vpop.permute.xlu0 %145
    %v147 = vlaneseq
    %v148 = vshrl.u32 %v147, 7
    %v149 = vadd.s32 %v148, 64
    %150 = vset.pattern.permute.xlu0 %v149
    %151 = vperm.xlu0 %150, %v98
    %v152 = vpop.permute.xlu0 %151
    %v153 = vlaneseq
    %v154 = vshrl.u32 %v153, 7
    %v155 = vadd.s32 %v154, 72
    %156 = vset.pattern.permute.xlu0 %v155
    %157 = vperm.xlu0 %156, %v98
    %v158 = vpop.permute.xlu0 %157
    %v159 = vlaneseq
    %v160 = vshrl.u32 %v159, 7
    %v161 = vadd.s32 %v160, 80
    %162 = vset.pattern.permute.xlu0 %v161
    %163 = vperm.xlu0 %162, %v98
    %v164 = vpop.permute.xlu0 %163
    %v165 = vlaneseq
    %v166 = vshrl.u32 %v165, 7
    %v167 = vadd.s32 %v166, 88
    %168 = vset.pattern.permute.xlu0 %v167
    %169 = vperm.xlu0 %168, %v98
    %v170 = vpop.permute.xlu0 %169
    %v171 = vlaneseq
    %v172 = vshrl.u32 %v171, 7
    %v173 = vadd.s32 %v172, 96
    %174 = vset.pattern.permute.xlu0 %v173
    %175 = vperm.xlu0 %174, %v98
    %v176 = vpop.permute.xlu0 %175
    %v177 = vlaneseq
    %v178 = vshrl.u32 %v177, 7
    %v179 = vadd.s32 %v178, 104
    %180 = vset.pattern.permute.xlu0 %v179
    %181 = vperm.xlu0 %180, %v98
    %v182 = vpop.permute.xlu0 %181
    %v183 = vlaneseq
    %v184 = vshrl.u32 %v183, 7
    %v185 = vadd.s32 %v184, 112
    %186 = vset.pattern.permute.xlu0 %v185
    %187 = vperm.xlu0 %186, %v98
    %v188 = vpop.permute.xlu0 %187
    %v189 = vlaneseq
    %v190 = vshrl.u32 %v189, 7
    %v191 = vadd.s32 %v190, 120
    %192 = vset.pattern.permute.xlu0 %v191
    %193 = vperm.xlu0 %192, %v98
    %v194 = vpop.permute.xlu0 %193
    %v195 = vperm.slane %v69, 0
    %v196 = vmul.f32 %v104, %v195
    %v197 = vmul.f32 %v110, %v195
    %v198 = vmul.f32 %v116, %v195
    %v199 = vmul.f32 %v122, %v195
    %v200 = vmul.f32 %v128, %v195
    %v201 = vmul.f32 %v134, %v195
    %v202 = vmul.f32 %v140, %v195
    %v203 = vmul.f32 %v146, %v195
    %v204 = vmul.f32 %v152, %v195
    %v205 = vmul.f32 %v158, %v195
    %v206 = vmul.f32 %v164, %v195
    %v207 = vmul.f32 %v170, %v195
    %v208 = vmul.f32 %v176, %v195
    %v209 = vmul.f32 %v182, %v195
    %v210 = vmul.f32 %v188, %v195
    %v211 = vmul.f32 %v194, %v195
    %v212 = vperm.slane %v95, 0
    %v213 = vsub.f32 %v196, %v212
    %v214 = vsub.f32 %v197, %v212
    %v215 = vsub.f32 %v198, %v212
    %v216 = vsub.f32 %v199, %v212
    %v217 = vsub.f32 %v200, %v212
    %v218 = vsub.f32 %v201, %v212
    %v219 = vsub.f32 %v202, %v212
    %v220 = vsub.f32 %v203, %v212
    %v221 = vsub.f32 %v204, %v212
    %v222 = vsub.f32 %v205, %v212
    %v223 = vsub.f32 %v206, %v212
    %v224 = vsub.f32 %v207, %v212
    %v225 = vsub.f32 %v208, %v212
    %v226 = vsub.f32 %v209, %v212
    %v227 = vsub.f32 %v210, %v212
    %v228 = vsub.f32 %v211, %v212
    %v229 = vmul.f32 %v213, 1.442695
    %v230 = vpow.pop %v229
    %v231 = vmul.f32 %v214, 1.442695
    %v232 = vpow.pop %v231
    %v233 = vmul.f32 %v215, 1.442695
    %v234 = vpow.pop %v233
    %v235 = vmul.f32 %v216, 1.442695
    %v236 = vpow.pop %v235
    %v237 = vmul.f32 %v217, 1.442695
    %v238 = vpow.pop %v237
    %v239 = vmul.f32 %v218, 1.442695
    %v240 = vpow.pop %v239
    %v241 = vmul.f32 %v219, 1.442695
    %v242 = vpow.pop %v241
    %v243 = vmul.f32 %v220, 1.442695
    %v244 = vpow.pop %v243
    %v245 = vmul.f32 %v221, 1.442695
    %v246 = vpow.pop %v245
    %v247 = vmul.f32 %v222, 1.442695
    %v248 = vpow.pop %v247
    %v249 = vmul.f32 %v223, 1.442695
    %v250 = vpow.pop %v249
    %v251 = vmul.f32 %v224, 1.442695
    %v252 = vpow.pop %v251
    %v253 = vmul.f32 %v225, 1.442695
    %v254 = vpow.pop %v253
    %v255 = vmul.f32 %v226, 1.442695
    %v256 = vpow.pop %v255
    %v257 = vmul.f32 %v227, 1.442695
    %v258 = vpow.pop %v257
    %v259 = vmul.f32 %v228, 1.442695
    %v260 = vpow.pop %v259
    %v261 = vsel %vm70, %v69, 1.0
    %262 = vmatpush.msra.mxu0 %v260
    %263 = vmatpush.msra.mxu0 %v258
    %264 = vmatpush.msra.mxu0 %v256
    %265 = vmatpush.msra.mxu0 %v254
    %266 = vmatpush.msra.mxu0 %v252
    %267 = vmatpush.msra.mxu0 %v250
    %268 = vmatpush.msra.mxu0 %v248
    %269 = vmatpush.msra.mxu0 %v246
    %270 = vmatpush.msra.mxu0 %v244
    %271 = vmatpush.msra.mxu0 %v242
    %272 = vmatpush.msra.mxu0 %v240
    %273 = vmatpush.msra.mxu0 %v238
    %274 = vmatpush.msra.mxu0 %v236
    %275 = vmatpush.msra.mxu0 %v234
    %276 = vmatpush.msra.mxu0 %v232
    %277 = vmatpush.msra.mxu0 %v230
    %278 = vmatmul.f32.gmra.mxu0 %v261
    %v279 = vpop.f32.mrf.mxu0
    %v280 = vadd.f32 0.0, %v279
    %281 = vdwg.mxu0
    %v283 = vrot.slane %v280, 1
    %v285 = vrcp.pop %v283
    %v286 = vmul.f32 %v283, %v285
    %v287 = vsub.f32 1.0, %v286
    %v288 = vmul.f32 %v285, %v287
    %v289 = vadd.f32 %v285, %v288
    %vm290 = vweird.f32 %v283
    %vm291 = vweird.f32 %v285
    %vm292 = vmor %vm290, %vm291
    %v293 = vsel %vm292, %v285, %v289
    %v294 = vand.u32 2147483647, %v283
    %vm295 = vcmp.eq.f32.partialorder %v294, 8.507059e+37
    %v296 = vand.u32 %v283, 2147483648
    %v297 = vor.u32 1.1754944e-38, %v296
    %v298 = vsel %vm295, %v297, %v293
    %v299 = vmul.f32 %v280, %v298
    %300 = vst [vmem:[#allocation2] sm:$0x1] %v299
    %v301 = vld [vmem:[%s1 + $0x1] sm:$0x1]
    %v302 = vmax.f32 %v301, 0.0
    %v303 = vsel %vm70, %v302, -inf
    %304 = vmax.xlane.f32.xlu0 %v303
    %v305 = vpop.xlane.xlu0 %304
    %v306 = vrot.slane %v305, 4
    %v307 = vmax.f32 %v305, %v306
    %v308 = vrot.slane %v307, 2
    %v309 = vmax.f32 %v307, %v308
    %v310 = vrot.slane %v309, 1
    %v311 = vmax.f32 %v309, %v310
    %s312 = vtos %v311
    %s313 = smul.f32 %s67, %s312
    %v314 = vsel %vm70, %v302, inf
    %315 = vmin.xlane.f32.xlu0 %v314
    %v316 = vpop.xlane.xlu0 %315
    %v317 = vrot.slane %v316, 4
    %v318 = vmin.f32 %v316, %v317
    %v319 = vrot.slane %v318, 2
    %v320 = vmin.f32 %v318, %v319
    %v321 = vrot.slane %v320, 1
    %v322 = vmin.f32 %v320, %v321
    %s323 = vtos %v322
    %s324 = smul.f32 %s67, %s323
    %s325 = smax.f32 %s313, %s324
    %v326 = vstv %s325
    %v327 = vmul.f32 %v326, %v302
    %v328 = vmul.f32 %v96, %v302
    %v329 = vperm.slane %v328, 0
    %v330 = vlaneseq
    %v331 = vshrl.u32 %v330, 7
    %333 = vset.pattern.permute.xlu0 %v331
    %334 = vperm.xlu0 %333, %v329
    %v335 = vpop.permute.xlu0 %334
    %v336 = vlaneseq
    %v337 = vshrl.u32 %v336, 7
    %v338 = vadd.s32 %v337, 8
    %339 = vset.pattern.permute.xlu0 %v338
    %340 = vperm.xlu0 %339, %v329
    %v341 = vpop.permute.xlu0 %340
    %v342 = vlaneseq
    %v343 = vshrl.u32 %v342, 7
    %v344 = vadd.s32 %v343, 16
    %345 = vset.pattern.permute.xlu0 %v344
    %346 = vperm.xlu0 %345, %v329
    %v347 = vpop.permute.xlu0 %346
    %v348 = vlaneseq
    %v349 = vshrl.u32 %v348, 7
    %v350 = vadd.s32 %v349, 24
    %351 = vset.pattern.permute.xlu0 %v350
    %352 = vperm.xlu0 %351, %v329
    %v353 = vpop.permute.xlu0 %352
    %v354 = vlaneseq
    %v355 = vshrl.u32 %v354, 7
    %v356 = vadd.s32 %v355, 32
    %357 = vset.pattern.permute.xlu0 %v356
    %358 = vperm.xlu0 %357, %v329
    %v359 = vpop.permute.xlu0 %358
    %v360 = vlaneseq
    %v361 = vshrl.u32 %v360, 7
    %v362 = vadd.s32 %v361, 40
    %363 = vset.pattern.permute.xlu0 %v362
    %364 = vperm.xlu0 %363, %v329
    %v365 = vpop.permute.xlu0 %364
    %v366 = vlaneseq
    %v367 = vshrl.u32 %v366, 7
    %v368 = vadd.s32 %v367, 48
    %369 = vset.pattern.permute.xlu0 %v368
    %370 = vperm.xlu0 %369, %v329
    %v371 = vpop.permute.xlu0 %370
    %v372 = vlaneseq
    %v373 = vshrl.u32 %v372, 7
    %v374 = vadd.s32 %v373, 56
    %375 = vset.pattern.permute.xlu0 %v374
    %376 = vperm.xlu0 %375, %v329
    %v377 = vpop.permute.xlu0 %376
    %v378 = vlaneseq
    %v379 = vshrl.u32 %v378, 7
    %v380 = vadd.s32 %v379, 64
    %381 = vset.pattern.permute.xlu0 %v380
    %382 = vperm.xlu0 %381, %v329
    %v383 = vpop.permute.xlu0 %382
    %v384 = vlaneseq
    %v385 = vshrl.u32 %v384, 7
    %v386 = vadd.s32 %v385, 72
    %387 = vset.pattern.permute.xlu0 %v386
    %388 = vperm.xlu0 %387, %v329
    %v389 = vpop.permute.xlu0 %388
    %v390 = vlaneseq
    %v391 = vshrl.u32 %v390, 7
    %v392 = vadd.s32 %v391, 80
    %393 = vset.pattern.permute.xlu0 %v392
    %394 = vperm.xlu0 %393, %v329
    %v395 = vpop.permute.xlu0 %394
    %v396 = vlaneseq
    %v397 = vshrl.u32 %v396, 7
    %v398 = vadd.s32 %v397, 88
    %399 = vset.pattern.permute.xlu0 %v398
    %400 = vperm.xlu0 %399, %v329
    %v401 = vpop.permute.xlu0 %400
    %v402 = vlaneseq
    %v403 = vshrl.u32 %v402, 7
    %v404 = vadd.s32 %v403, 96
    %405 = vset.pattern.permute.xlu0 %v404
    %406 = vperm.xlu0 %405, %v329
    %v407 = vpop.permute.xlu0 %406
    %v408 = vlaneseq
    %v409 = vshrl.u32 %v408, 7
    %v410 = vadd.s32 %v409, 104
    %411 = vset.pattern.permute.xlu0 %v410
    %412 = vperm.xlu0 %411, %v329
    %v413 = vpop.permute.xlu0 %412
    %v414 = vlaneseq
    %v415 = vshrl.u32 %v414, 7
    %v416 = vadd.s32 %v415, 112
    %417 = vset.pattern.permute.xlu0 %v416
    %418 = vperm.xlu0 %417, %v329
    %v419 = vpop.permute.xlu0 %418
    %v420 = vlaneseq
    %v421 = vshrl.u32 %v420, 7
    %v422 = vadd.s32 %v421, 120
    %423 = vset.pattern.permute.xlu0 %v422
    %424 = vperm.xlu0 %423, %v329
    %v425 = vpop.permute.xlu0 %424
    %v426 = vperm.slane %v302, 0
    %v427 = vmul.f32 %v335, %v426
    %v428 = vmul.f32 %v341, %v426
    %v429 = vmul.f32 %v347, %v426
    %v430 = vmul.f32 %v353, %v426
    %v431 = vmul.f32 %v359, %v426
    %v432 = vmul.f32 %v365, %v426
    %v433 = vmul.f32 %v371, %v426
    %v434 = vmul.f32 %v377, %v426
    %v435 = vmul.f32 %v383, %v426
    %v436 = vmul.f32 %v389, %v426
    %v437 = vmul.f32 %v395, %v426
    %v438 = vmul.f32 %v401, %v426
    %v439 = vmul.f32 %v407, %v426
    %v440 = vmul.f32 %v413, %v426
    %v441 = vmul.f32 %v419, %v426
    %v442 = vmul.f32 %v425, %v426
    %v443 = vperm.slane %v327, 0
    %v444 = vsub.f32 %v427, %v443
    %v445 = vsub.f32 %v428, %v443
    %v446 = vsub.f32 %v429, %v443
    %v447 = vsub.f32 %v430, %v443
    %v448 = vsub.f32 %v431, %v443
    %v449 = vsub.f32 %v432, %v443
    %v450 = vsub.f32 %v433, %v443
    %v451 = vsub.f32 %v434, %v443
    %v452 = vsub.f32 %v435, %v443
    %v453 = vsub.f32 %v436, %v443
    %v454 = vsub.f32 %v437, %v443
    %v455 = vsub.f32 %v438, %v443
    %v456 = vsub.f32 %v439, %v443
    %v457 = vsub.f32 %v440, %v443
    %v458 = vsub.f32 %v441, %v443
    %v459 = vsub.f32 %v442, %v443
    %v460 = vmul.f32 %v444, 1.442695
    %v461 = vpow.pop %v460
    %v462 = vmul.f32 %v445, 1.442695
    %v463 = vpow.pop %v462
    %v464 = vmul.f32 %v446, 1.442695
    %v465 = vpow.pop %v464
    %v466 = vmul.f32 %v447, 1.442695
    %v467 = vpow.pop %v466
    %v468 = vmul.f32 %v448, 1.442695
    %v469 = vpow.pop %v468
    %v470 = vmul.f32 %v449, 1.442695
    %v471 = vpow.pop %v470
    %v472 = vmul.f32 %v450, 1.442695
    %v473 = vpow.pop %v472
    %v474 = vmul.f32 %v451, 1.442695
    %v475 = vpow.pop %v474
    %v476 = vmul.f32 %v452, 1.442695
    %v477 = vpow.pop %v476
    %v478 = vmul.f32 %v453, 1.442695
    %v479 = vpow.pop %v478
    %v480 = vmul.f32 %v454, 1.442695
    %v481 = vpow.pop %v480
    %v482 = vmul.f32 %v455, 1.442695
    %v483 = vpow.pop %v482
    %v484 = vmul.f32 %v456, 1.442695
    %v485 = vpow.pop %v484
    %v486 = vmul.f32 %v457, 1.442695
    %v487 = vpow.pop %v486
    %v488 = vmul.f32 %v458, 1.442695
    %v489 = vpow.pop %v488
    %v490 = vmul.f32 %v459, 1.442695
    %v491 = vpow.pop %v490
    %v492 = vsel %vm70, %v302, 1.0
    %493 = vmatpush.msra.mxu0 %v491
    %494 = vmatpush.msra.mxu0 %v489
    %495 = vmatpush.msra.mxu0 %v487
    %496 = vmatpush.msra.mxu0 %v485
    %497 = vmatpush.msra.mxu0 %v483
    %498 = vmatpush.msra.mxu0 %v481
    %499 = vmatpush.msra.mxu0 %v479
    %500 = vmatpush.msra.mxu0 %v477
    %501 = vmatpush.msra.mxu0 %v475
    %502 = vmatpush.msra.mxu0 %v473
    %503 = vmatpush.msra.mxu0 %v471
    %504 = vmatpush.msra.mxu0 %v469
    %505 = vmatpush.msra.mxu0 %v467
    %506 = vmatpush.msra.mxu0 %v465
    %507 = vmatpush.msra.mxu0 %v463
    %508 = vmatpush.msra.mxu0 %v461
    %509 = vmatmul.f32.gmra.mxu0 %v492
    %v510 = vpop.f32.mrf.mxu0
    %v511 = vadd.f32 0.0, %v510
    %512 = vdwg.mxu0
    %v514 = vrot.slane %v511, 1
    %v516 = vrcp.pop %v514
    %v517 = vmul.f32 %v514, %v516
    %v518 = vsub.f32 1.0, %v517
    %v519 = vmul.f32 %v516, %v518
    %v520 = vadd.f32 %v516, %v519
    %vm521 = vweird.f32 %v514
    %vm522 = vweird.f32 %v516
    %vm523 = vmor %vm521, %vm522
    %v524 = vsel %vm523, %v516, %v520
    %v525 = vand.u32 2147483647, %v514
    %vm526 = vcmp.eq.f32.partialorder %v525, 8.507059e+37
    %v527 = vand.u32 %v514, 2147483648
    %v528 = vor.u32 1.1754944e-38, %v527
    %v529 = vsel %vm526, %v528, %v524
    %v530 = vmul.f32 %v511, %v529
    %531 = vst [vmem:[#allocation2 + $0x1] sm:$0x1] %v530
    %v532 = vld [vmem:[#allocation2] sm:$0x3]
    %v533 = vld [vmem:[#allocation4] sm:$0xff]
    %v534 = vld [vmem:[#allocation4 + $0x8] sm:$0xff]
    %v535 = vld [vmem:[#allocation4 + $0x10] sm:$0xff]
    %v536 = vld [vmem:[#allocation4 + $0x18] sm:$0xff]
    %v537 = vld [vmem:[#allocation4 + $0x20] sm:$0xff]
    %v538 = vld [vmem:[#allocation4 + $0x28] sm:$0xff]
    %v539 = vld [vmem:[#allocation4 + $0x30] sm:$0xff]
    %v540 = vld [vmem:[#allocation4 + $0x38] sm:$0xff]
    %v541 = vld [vmem:[#allocation4 + $0x40] sm:$0xff]
    %v542 = vld [vmem:[#allocation4 + $0x48] sm:$0xff]
    %v543 = vld [vmem:[#allocation4 + $0x50] sm:$0xff]
    %v544 = vld [vmem:[#allocation4 + $0x58] sm:$0xff]
    %v545 = vld [vmem:[#allocation4 + $0x60] sm:$0xff]
    %v546 = vld [vmem:[#allocation4 + $0x68] sm:$0xff]
    %v547 = vld [vmem:[#allocation4 + $0x70] sm:$0xff]
    %v548 = vld [vmem:[#allocation4 + $0x78] sm:$0xff]
    %v549 = vld [vmem:[#allocation7] sm:$0x1]
    %v550 = vperm.slane %v549, 0
    %551 = vmatpush.msra.mxu0 %v548
    %552 = vmatpush.msra.mxu0 %v547
    %553 = vmatpush.msra.mxu0 %v546
    %554 = vmatpush.msra.mxu0 %v545
    %555 = vmatpush.msra.mxu0 %v544
    %556 = vmatpush.msra.mxu0 %v543
    %557 = vmatpush.msra.mxu0 %v542
    %558 = vmatpush.msra.mxu0 %v541
    %559 = vmatpush.msra.mxu0 %v540
    %560 = vmatpush.msra.mxu0 %v539
    %561 = vmatpush.msra.mxu0 %v538
    %562 = vmatpush.msra.mxu0 %v537
    %563 = vmatpush.msra.mxu0 %v536
    %564 = vmatpush.msra.mxu0 %v535
    %565 = vmatpush.msra.mxu0 %v534
    %566 = vmatpush.msra.mxu0 %v533
    %567 = vmatmul.f32.gmra.mxu0 %v532
    %v568 = vpop.f32.mrf.mxu0
    %v569 = vadd.f32 %v550, %v568
    %570 = vdwg.mxu0
    %v571 = vmax.f32 %v569, 0.0
    %v572 = vld [vmem:[#allocation9] sm:$0xff]
    %v573 = vld [vmem:[#allocation9 + $0x8] sm:$0xff]
    %v574 = vld [vmem:[#allocation9 + $0x10] sm:$0xff]
    %v575 = vld [vmem:[#allocation9 + $0x18] sm:$0xff]
    %v576 = vld [vmem:[#allocation9 + $0x20] sm:$0xff]
    %v577 = vld [vmem:[#allocation9 + $0x28] sm:$0xff]
    %v578 = vld [vmem:[#allocation9 + $0x30] sm:$0xff]
    %v579 = vld [vmem:[#allocation9 + $0x38] sm:$0xff]
    %v580 = vld [vmem:[#allocation9 + $0x40] sm:$0xff]
    %v581 = vld [vmem:[#allocation9 + $0x48] sm:$0xff]
    %v582 = vld [vmem:[#allocation9 + $0x50] sm:$0xff]
    %v583 = vld [vmem:[#allocation9 + $0x58] sm:$0xff]
    %v584 = vld [vmem:[#allocation9 + $0x60] sm:$0xff]
    %v585 = vld [vmem:[#allocation9 + $0x68] sm:$0xff]
    %v586 = vld [vmem:[#allocation9 + $0x70] sm:$0xff]
    %v587 = vld [vmem:[#allocation9 + $0x78] sm:$0xff]
    %v588 = vld [vmem:[#allocation7 + $0x1] sm:$0x1]
    %v589 = vperm.slane %v588, 0
    %590 = vmatpush.msra.mxu0 %v587
    %591 = vmatpush.msra.mxu0 %v586
    %592 = vmatpush.msra.mxu0 %v585
    %593 = vmatpush.msra.mxu0 %v584
    %594 = vmatpush.msra.mxu0 %v583
    %595 = vmatpush.msra.mxu0 %v582
    %596 = vmatpush.msra.mxu0 %v581
    %597 = vmatpush.msra.mxu0 %v580
    %598 = vmatpush.msra.mxu0 %v579
    %599 = vmatpush.msra.mxu0 %v578
    %600 = vmatpush.msra.mxu0 %v577
    %601 = vmatpush.msra.mxu0 %v576
    %602 = vmatpush.msra.mxu0 %v575
    %603 = vmatpush.msra.mxu0 %v574
    %604 = vmatpush.msra.mxu0 %v573
    %605 = vmatpush.msra.mxu0 %v572
    %606 = vmatmul.f32.gmra.mxu0 %v571
    %v607 = vpop.f32.mrf.mxu0
    %v608 = vadd.f32 %v589, %v607
    %609 = vdwg.mxu0
    %v610 = vsub.f32 0.0, %v608
    %v611 = vmul.f32 %v610, 1.442695
    %v612 = vpow.pop %v611
    %v613 = vadd.f32 %v612, 1.0
    %v614 = vrcp.pop %v613
    %v615 = vmul.f32 %v613, %v614
    %v616 = vsub.f32 1.0, %v615
    %v617 = vmul.f32 %v614, %v616
    %v618 = vadd.f32 %v614, %v617
    %vm619 = vweird.f32 %v613
    %vm620 = vweird.f32 %v614
    %vm621 = vmor %vm619, %vm620
    %v622 = vsel %vm621, %v614, %v618
    %v623 = vand.u32 2147483647, %v613
    %vm624 = vcmp.eq.f32.partialorder %v623, 8.507059e+37
    %v625 = vand.u32 %v613, 2147483648
    %v626 = vor.u32 1.1754944e-38, %v625
    %v627 = vsel %vm624, %v626, %v622
    %v628 = vmul.f32 1.0, %v627
    %629 = vst [vmem:[#allocation10] sm:$0x3] %v628
    // Predicated region
    $region34: #{tpu_custom_call.1} parent=1 // pred_check
      _
    $region35: #{tpu_custom_call.1} parent=1 // pred_check_branch
      %631 = sbr.rel (0) target = $region37
    $region36: #{tpu_custom_call.1} parent=1 // pred_region
      %633 = vsyncadd [#allocation6], 0
      %s635 = sshll.u32 [#allocation10], 4
      %s636 = int_to_ptr.vmem [resolvable:$true] %s635
      %s637 = sshll.u32 %s5, 4
      %s638 = int_to_ptr.hbm [resolvable:$true] %s637
      %640 = dma.vmem_to_hbm [thread:$0]  %s636, 32, %s638, [#allocation6]
    $region37: #{tpu_custom_call.1} parent=1 // pred_fallthru
      _
    // Predicated region
    $region38: #{tpu_custom_call.1} parent=1 // pred_check
      _
    $region39: #{tpu_custom_call.1} parent=1 // pred_check_branch
      %642 = sbr.rel (0) target = $region41
    $region40: #{tpu_custom_call.1} parent=1 // pred_region
      %644 = dma.done [#allocation6], 32
    $region41: #{tpu_custom_call.1} parent=1 // pred_fallthru
      _
    %645 = vsyncpa [#allocation5], 1
    %646 = vsyncpa [#allocation8], 1
    %647 = vsyncpa [#allocation6], 1

</llo_original>
